<compile_context>
chip_gen: v7x
topology: tpu7x:2x2x1
jax: 0.10.0
libtpu: 0.0.40
codegen_flags: <defaults>
</compile_context>

<pallas_src>
import functools
import math

import jax
import jax.numpy as jnp
from jax.experimental import pallas as pl
from jax.experimental.pallas import tpu as pltpu


def _round_up(x, m):
    return -(-x // m) * m


def _tile_update(s, lab_eq, m_sc, l_sc, ps_sc, denom_mask=None, kv_valid=None):
    """Online-softmax accumulation of one (TN, TM) scaled-logits tile into the
    lane-dense running max / denominator / positive-sum scratch rows.

    Fast path (denom_mask is None): all contrast rows in the tile are valid and
    none is the anchor itself, so no validity/self masking is needed.
    """
    if kv_valid is not None:
        s_for_max = jnp.where(kv_valid, s, jnp.float32(-1e30))
    else:
        s_for_max = s
    m_prev = m_sc[...]
    # Row max includes the self-similarity diagonal (matches torch.max(..., 1)).
    m_new = jnp.maximum(m_prev, jnp.max(s_for_max, axis=0, keepdims=True))
    alpha = jnp.exp(m_prev - m_new)
    p = jnp.exp(s - m_new)
    if denom_mask is not None:
        p = jnp.where(denom_mask, p, jnp.float32(0.0))
        pos_mask = jnp.logical_and(lab_eq, denom_mask)
    else:
        pos_mask = lab_eq
    l_sc[...] = alpha * l_sc[...] + jnp.sum(p, axis=0, keepdims=True)
    # Accumulate sum(pos_mask * raw_logits); the max shift and log-denominator
    # are folded in once at finalize (log_prob is never materialized).
    ps_sc[...] = ps_sc[...] + jnp.sum(
        jnp.where(pos_mask, s, jnp.float32(0.0)), axis=0, keepdims=True)
    m_sc[...] = m_new


def _supcon_kernel(at_ref, c_ref, lab_a_ref, lab_c_ref, icnt_ref, out_ref,
                   m_sc, l_sc, ps_sc, *,
                   inv_temp, loss_scale, n_valid, tm, tn):
    # at_ref   : [Dp, TM]  anchor features, pre-transposed (bf16/f32)
    # c_ref    : [TN, Dp]  contrast feature tile
    # lab_a_ref: [1, TM]   int32 anchor labels (lane-dense)
    # lab_c_ref: [TN, 1]   int32 contrast labels (sublane-dense; small, see note)
    # icnt_ref : [1, TM]   f32 1/positives-per-anchor (host precomputed)
    # out_ref  : [1, TM]   f32 per-anchor loss (lane-dense)
    # m_sc/l_sc/ps_sc : [1, TM] f32 running max / denom / sum(pmask * raw logits)
    i = pl.program_id(0)
    j = pl.program_id(1)

    @pl.when(j == 0)
    def _init():
        m_sc[...] = jnp.full(m_sc.shape, -1e30, m_sc.dtype)
        l_sc[...] = jnp.zeros(l_sc.shape, l_sc.dtype)
        ps_sc[...] = jnp.zeros(ps_sc.shape, ps_sc.dtype)

    # Canonical [M,K] @ [K,N] matmul: s[c, a] = <contrast_c, anchor_a> / T.
    s = jnp.dot(c_ref[...], at_ref[...],
                preferred_element_type=jnp.float32) * jnp.float32(inv_temp)

    # Label equality (tn,1) vs (1,tm) -> (tn,tm); cheap, needed on both paths.
    lab_eq = lab_c_ref[...] == lab_a_ref[...]

    # Masked path only when the tile touches the self-diagonal or padded rows.
    touches_diag = jnp.logical_and(i * tm < (j + 1) * tn, j * tn < (i + 1) * tm)
    touches_pad = (j + 1) * tn > n_valid
    needs_mask = jnp.logical_or(touches_diag, touches_pad)

    @pl.when(needs_mask)
    def _masked():
        kv_ids = j * tn + jax.lax.broadcasted_iota(jnp.int32, (tn, 1), 0)
        q_ids = i * tm + jax.lax.broadcasted_iota(jnp.int32, (1, tm), 1)
        kv_valid = kv_ids < n_valid                                  # (TN, 1)
        denom_mask = jnp.logical_and(kv_ids != q_ids, kv_valid)      # (TN, TM)
        _tile_update(s, lab_eq, m_sc, l_sc, ps_sc,
                     denom_mask=denom_mask, kv_valid=kv_valid)

    @pl.when(jnp.logical_not(needs_mask))
    def _fast():
        _tile_update(s, lab_eq, m_sc, l_sc, ps_sc)

    @pl.when(j == pl.num_programs(1) - 1)
    def _finalize():
        # mean_log_prob_pos = sum(pmask*(s - m - log l)) / cnt
        #                   = ps * (1/cnt) - m - log(l)
        mlpp = ps_sc[...] * icnt_ref[...] - m_sc[...] - jnp.log(l_sc[...])
        out_ref[...] = jnp.float32(-loss_scale) * mlpp


def _default_tiles(n_total, d_pad, itemsize):
    """Per-generation (TM, TN) defaults.

    TM = anchor/lane tile (raises arithmetic intensity of the re-streamed
    contrast matrix), TN = contrast/reduction tile.
    """
    try:
        kind = jax.devices()[0].device_kind.lower()
    except Exception:
        kind = ""
    if "v5" in kind:
        tn, tm_cap = 128, 512       # native 128-wide MXU, lowest HBM BW
    elif "v7" in kind:
        tn, tm_cap = 256, 512       # keep >= 2 anchor tiles for the 2 TCs
    else:                           # v6e and unknown/default
        tn, tm_cap = 256, 1024      # highest flops/byte machine balance

    n_cap = max(128, int(pl.next_power_of_2(max(n_total, 1))))
    tn = min(tn, n_cap)
    tm = min(tm_cap, n_cap)
    # Keep >= 2 anchor tiles when possible (TensorCore sharding on the
    # "parallel" axis + pipeline overlap).
    # TODO(synk): consider pltpu.CORE_PARALLEL on axis 0 for explicit v7x
    # TensorCore sharding once validated.
    while tm > 128 and _round_up(n_total, max(tm, tn)) // tm < 2:
        tm //= 2
    # Keep the double-buffered anchor block within a modest VMEM budget.
    while tm > 128 and 2 * tm * d_pad * itemsize > (12 << 20):
        tm //= 2
    return tm, tn


def supcon_loss(features, labels=None, mask=None, *,
                temperature=0.07, contrast_mode='all',
                base_temperature=0.07, reduction='mean',
                matmul_dtype=jnp.bfloat16, tm=None, tn=None):
    """JAX/Pallas port of SupConLoss.forward.

    features: [bsz, n_views, ...] float
    labels  : [bsz] int, or None (None+None => SimCLR / eye mask)
    mask    : [bsz, bsz] float, or None
    """
    if features.ndim < 3:
        raise ValueError('`features` needs to be [bsz, n_views, ...]')
    if features.ndim > 3:
        features = features.reshape(features.shape[0], features.shape[1], -1)
    bsz, n_views, dim = features.shape

    if labels is not None and mask is not None:
        raise ValueError('Cannot define both `labels` and `mask`')
    if mask is not None:
        # TODO(synk): arbitrary user-supplied [bsz, bsz] masks (possibly
        # asymmetric / non-equivalence) are not expressible as per-row labels;
        # the in-kernel mask regeneration path does not cover them.
        raise NotImplementedError('explicit `mask` path not implemented')
    if labels is None:
        # SimCLR: mask = eye(bsz)  <=>  each sample is its own class.
        labels = jnp.arange(bsz, dtype=jnp.int32)
    labels = jnp.asarray(labels).reshape(-1).astype(jnp.int32)
    if labels.shape[0] != bsz:
        raise ValueError('Num of labels does not match num of features')

    if contrast_mode == 'one':
        # TODO(synk): contrast_mode='one' (anchors = features[:, 0]) not implemented.
        raise NotImplementedError("contrast_mode='one' not implemented")
    elif contrast_mode != 'all':
        raise ValueError('Unknown mode: {}'.format(contrast_mode))

    contrast_count = n_views
    anchor_count = contrast_count
    n_total = anchor_count * bsz

    # contrast_feature = cat(unbind(features, dim=1), dim=0) -> [N, D]
    contrast_feature = jnp.transpose(features, (1, 0, 2)).reshape(n_total, dim)

    # --- host-side precompute (O(bsz^2) label-equality; fine at typical bsz) --
    # positives per anchor = (#same-label samples incl. self) * n_views - 1.
    # 1/cnt is precomputed so the kernel finalize is a multiply; cnt == 0 gives
    # inf here and 0*inf = NaN in-kernel, matching PyTorch's 0/0 behaviour.
    same = (labels[:, None] == labels[None, :]).astype(jnp.float32)
    pos_cnt_sample = same.sum(axis=1) * jnp.float32(n_views) - 1.0
    inv_cnt = jnp.tile(1.0 / pos_cnt_sample, n_views)      # [N]
    labels_tiled = jnp.tile(labels, n_views)                # [N]

    # --- tiling / padding ------------------------------------------------------
    itemsize = jnp.dtype(matmul_dtype).itemsize
    d_pad = max(128, _round_up(dim, 128))
    tm_d, tn_d = _default_tiles(n_total, d_pad, itemsize)
    tm = tm_d if tm is None else int(tm)
    tn = tn_d if tn is None else int(tn)
    n_pad = _round_up(n_total, math.lcm(tm, tn))

    feat_pad = jnp.zeros((n_pad, d_pad), dtype=matmul_dtype)
    feat_pad = feat_pad.at[:n_total, :dim].set(contrast_feature.astype(matmul_dtype))
    feat_t = feat_pad.T                                      # [Dp, Np] canonical RHS

    pad_label = labels.min() - 1                             # never matches a real label
    lab_pad = jnp.full((n_pad,), pad_label, dtype=jnp.int32).at[:n_total].set(labels_tiled)
    icnt_pad = jnp.zeros((n_pad,), dtype=jnp.float32).at[:n_total].set(inv_cnt)

    lab_lane = lab_pad.reshape(1, n_pad)    # anchor labels, lane-dense
    # NOTE: contrast labels are a (N,1) sublane-dense stream (per-j strided DMA);
    # small in absolute bytes, flagged low priority in review.
    lab_sub = lab_pad.reshape(n_pad, 1)
    icnt_lane = icnt_pad.reshape(1, n_pad)

    kernel = functools.partial(
        _supcon_kernel,
        inv_temp=1.0 / temperature,
        loss_scale=temperature / base_temperature,
        n_valid=n_total, tm=tm, tn=tn)

    grid = (n_pad // tm, n_pad // tn)   # (anchor tiles ["parallel"], contrast tiles ["arbitrary"])

    flops = 2 * n_pad * n_pad * d_pad
    bytes_accessed = ((grid[0] + 1) * n_pad * d_pad * itemsize   # contrast restream + anchors
                      + 4 * n_pad * 4 + n_pad * 4)
    cost = pl.CostEstimate(flops=int(flops), transcendentals=int(n_pad * n_pad),
                           bytes_accessed=int(bytes_accessed))

    vmem_est = (2 * tm * d_pad * itemsize      # double-buffered anchor block
                + 2 * tn * d_pad * itemsize    # double-buffered contrast block
                + 6 * tn * tm * 4              # s + elementwise f32 temporaries
                + 32 * tm * 4)                 # lane-dense vectors + scratch
    vmem_limit = int(min(max(vmem_est + (8 << 20), 32 << 20), 56 << 20))

    out = pl.pallas_call(
        kernel,
        out_shape=jax.ShapeDtypeStruct((1, n_pad), jnp.float32),
        grid_spec=pltpu.PrefetchScalarGridSpec(
            num_scalar_prefetch=0,
            grid=grid,
            in_specs=[
                pl.BlockSpec((d_pad, tm), lambda i, j: (0, i)),  # anchors^T [K, TM]
                pl.BlockSpec((tn, d_pad), lambda i, j: (j, 0)),  # contrast [TN, K]
                pl.BlockSpec((1, tm), lambda i, j: (0, i)),      # anchor labels
                pl.BlockSpec((tn, 1), lambda i, j: (j, 0)),      # contrast labels
                pl.BlockSpec((1, tm), lambda i, j: (0, i)),      # 1 / pos_cnt
            ],
            out_specs=pl.BlockSpec((1, tm), lambda i, j: (0, i)),
            scratch_shapes=[pltpu.VMEM((1, tm), jnp.float32)] * 3,
        ),
        compiler_params=pltpu.CompilerParams(
            dimension_semantics=("parallel", "arbitrary"),
            vmem_limit_bytes=vmem_limit),
        cost_estimate=cost,
    )(feat_t, feat_pad, lab_lane, lab_sub, icnt_lane)

    per_anchor_loss = out[0, :n_total]
    loss = per_anchor_loss.reshape(anchor_count, bsz)
    if reduction == 'mean':
        loss = jnp.mean(loss)
    return loss


def _supcon_loss_ref(features, labels, *, temperature=0.07,
                     base_temperature=0.07):
    """Pure-JAX reference (mirrors the PyTorch code) for validation."""
    bsz, n_views, dim = features.shape
    labels = labels.reshape(-1, 1)
    mask = (labels == labels.T).astype(jnp.float32)
    cf = jnp.transpose(features, (1, 0, 2)).reshape(n_views * bsz, dim)
    logits = (cf @ cf.T) / temperature
    logits = logits - jnp.max(logits, axis=1, keepdims=True)
    n = n_views * bsz
    lmask = 1.0 - jnp.eye(n, dtype=jnp.float32)
    pmask = jnp.tile(mask, (n_views, n_views)) * lmask
    exp_logits = jnp.exp(logits) * lmask
    log_prob = logits - jnp.log(jnp.sum(exp_logits, axis=1, keepdims=True))
    mlpp = jnp.sum(pmask * log_prob, axis=1) / jnp.sum(pmask, axis=1)
    return jnp.mean(-(temperature / base_temperature) * mlpp)


if __name__ == "__main__":
    key = jax.random.PRNGKey(0)
    k_feat, k_lab, k_feat2, k_lab2 = jax.random.split(key, 4)

    # --- small single-tile case (masked path only) ----------------------------
    bsz, n_views, feat_dim = 8, 2, 32
    features = jax.random.normal(k_feat, (bsz, n_views, feat_dim), dtype=jnp.float32)
    features = features / jnp.linalg.norm(features, axis=-1, keepdims=True)
    labels = jax.random.randint(k_lab, (bsz,), 0, 4)

    loss = jax.block_until_ready(supcon_loss(features, labels=labels))

    # Matched-precision reference (bf16-rounded features, f32 math).
    feats_rt = features.astype(jnp.bfloat16).astype(jnp.float32)
    loss_ref = _supcon_loss_ref(feats_rt, labels)
    assert jnp.allclose(loss, loss_ref, atol=1e-4, rtol=1e-4), (loss, loss_ref)
    # Full-f32 reference: overall accuracy sanity for the bf16 matmul path.
    loss_ref_f32 = _supcon_loss_ref(features, labels)
    assert jnp.allclose(loss, loss_ref_f32, atol=5e-2, rtol=5e-2), (loss, loss_ref_f32)

    # --- multi-tile case: exercises the fast (unmasked) off-diagonal tiles,
    #     diagonal tiles and the padded last contrast tile on a 3x3 grid. ------
    bsz2, n_views2, feat_dim2 = 160, 2, 32
    features2 = jax.random.normal(k_feat2, (bsz2, n_views2, feat_dim2),
                                  dtype=jnp.float32)
    features2 = features2 / jnp.linalg.norm(features2, axis=-1, keepdims=True)
    labels2 = jax.random.randint(k_lab2, (bsz2,), 0, 4)

    loss2 = jax.block_until_ready(
        supcon_loss(features2, labels=labels2, tm=128, tn=128))
    feats2_rt = features2.astype(jnp.bfloat16).astype(jnp.float32)
    loss2_ref = _supcon_loss_ref(feats2_rt, labels2)
    assert jnp.allclose(loss2, loss2_ref, atol=2e-3, rtol=2e-3), (loss2, loss2_ref)
    loss2_ref_f32 = _supcon_loss_ref(features2, labels2)
    assert jnp.allclose(loss2, loss2_ref_f32, atol=5e-2, rtol=5e-2), (loss2, loss2_ref_f32)

    print("KERNEL_OK")
</pallas_src>

<mosaic_0001>
module attributes {stable_mosaic.version = 11 : i64} {
  func.func @_supcon_kernel(%arg0: i32, %arg1: i32, %arg2: memref<128x128xbf16, #tpu.memory_space<vmem>>, %arg3: memref<128x128xbf16, #tpu.memory_space<vmem>>, %arg4: memref<1x128xi32, #tpu.memory_space<vmem>>, %arg5: memref<128x1xi32, #tpu.memory_space<vmem>>, %arg6: memref<1x128xf32, #tpu.memory_space<vmem>>, %arg7: memref<1x128xf32, #tpu.memory_space<vmem>>, %arg8: memref<1x128xf32, #tpu.memory_space<vmem>>, %arg9: memref<1x128xf32, #tpu.memory_space<vmem>>, %arg10: memref<1x128xf32, #tpu.memory_space<vmem>>) attributes {dimension_semantics = [#tpu.dimension_semantics<parallel>, #tpu.dimension_semantics<arbitrary>], iteration_bounds = array<i64: 1, 1>, scalar_prefetch = 0 : i64, scratch_operands = 3 : i64, tpu.core_type = #tpu.core_type<tc>, window_params = [{transform_indices = @transform_0, window_bounds = array<i64: 128, 128>}, {transform_indices = @transform_1, window_bounds = array<i64: 128, 128>}, {transform_indices = @transform_2, window_bounds = array<i64: 1, 128>}, {transform_indices = @transform_3, window_bounds = array<i64: 128, 1>}, {transform_indices = @transform_4, window_bounds = array<i64: 1, 128>}, {transform_indices = @transform_5, window_bounds = array<i64: 1, 128>}]} {
    %c0_i32 = arith.constant 0 : i32
    %0 = arith.cmpi eq, %arg1, %c0_i32 : i32
    %1 = arith.extui %0 : i1 to i32
    %c0_i32_0 = arith.constant 0 : i32
    %2 = arith.cmpi ne, %1, %c0_i32_0 : i32
    scf.if %2 {
      %cst_19 = arith.constant -1.000000e+30 : f32
      %34 = vector.broadcast %cst_19 : f32 to vector<1x128xf32>
      %c0_20 = arith.constant 0 : index
      %c0_21 = arith.constant 0 : index
      %35 = vector.load %arg8[%c0_20, %c0_21] : memref<1x128xf32, #tpu.memory_space<vmem>>, vector<1x128xf32>
      tpu.vector_store %arg8[%c0_20, %c0_21], %34 {strides = array<i32>} : memref<1x128xf32, #tpu.memory_space<vmem>>, vector<1x128xf32>,
      %cst_22 = arith.constant 0.000000e+00 : f32
      %36 = vector.broadcast %cst_22 : f32 to vector<1x128xf32>
      %c0_23 = arith.constant 0 : index
      %c0_24 = arith.constant 0 : index
      %37 = vector.load %arg9[%c0_23, %c0_24] : memref<1x128xf32, #tpu.memory_space<vmem>>, vector<1x128xf32>
      tpu.vector_store %arg9[%c0_23, %c0_24], %36 {strides = array<i32>} : memref<1x128xf32, #tpu.memory_space<vmem>>, vector<1x128xf32>,
      %cst_25 = arith.constant 0.000000e+00 : f32
      %38 = vector.broadcast %cst_25 : f32 to vector<1x128xf32>
      %c0_26 = arith.constant 0 : index
      %c0_27 = arith.constant 0 : index
      %39 = vector.load %arg10[%c0_26, %c0_27] : memref<1x128xf32, #tpu.memory_space<vmem>>, vector<1x128xf32>
      tpu.vector_store %arg10[%c0_26, %c0_27], %38 {strides = array<i32>} : memref<1x128xf32, #tpu.memory_space<vmem>>, vector<1x128xf32>,
    } else {
    }
    %c0 = arith.constant 0 : index
    %c0_1 = arith.constant 0 : index
    %3 = vector.load %arg3[%c0, %c0_1] : memref<128x128xbf16, #tpu.memory_space<vmem>>, vector<128x128xbf16>
    %c0_2 = arith.constant 0 : index
    %c0_3 = arith.constant 0 : index
    %4 = vector.load %arg2[%c0_2, %c0_3] : memref<128x128xbf16, #tpu.memory_space<vmem>>, vector<128x128xbf16>
    %cst = arith.constant dense<0.000000e+00> : vector<128x128xf32>
    %5 = tpu.matmul %3, %4, %cst {dimension_numbers = #tpu.dot_dimension_numbers<[1], [0], [0], [1], [0, 0, 1, 1], [], []>} : vector<128x128xbf16>, vector<128x128xbf16>, vector<128x128xf32> -> vector<128x128xf32>
    %cst_4 = arith.constant 14.2857141 : f32
    %6 = vector.broadcast %cst_4 : f32 to vector<128x128xf32>
    %7 = arith.mulf %5, %6 : vector<128x128xf32>
    %c0_5 = arith.constant 0 : index
    %c0_6 = arith.constant 0 : index
    %8 = vector.load %arg5[%c0_5, %c0_6] : memref<128x1xi32, #tpu.memory_space<vmem>>, vector<128x1xi32>
    %c0_7 = arith.constant 0 : index
    %c0_8 = arith.constant 0 : index
    %9 = vector.load %arg4[%c0_7, %c0_8] : memref<1x128xi32, #tpu.memory_space<vmem>>, vector<1x128xi32>
    %10 = vector.broadcast %8 : vector<128x1xi32> to vector<128x128xi32>
    %11 = vector.broadcast %9 : vector<1x128xi32> to vector<128x128xi32>
    %12 = arith.cmpi eq, %10, %11 : vector<128x128xi32>
    %c128_i32 = arith.constant 128 : i32
    %13 = arith.muli %arg0, %c128_i32 : i32
    %c1_i32 = arith.constant 1 : i32
    %14 = arith.addi %arg1, %c1_i32 : i32
    %c128_i32_9 = arith.constant 128 : i32
    %15 = arith.muli %14, %c128_i32_9 : i32
    %16 = arith.cmpi slt, %13, %15 : i32
    %c128_i32_10 = arith.constant 128 : i32
    %17 = arith.muli %arg1, %c128_i32_10 : i32
    %c1_i32_11 = arith.constant 1 : i32
    %18 = arith.addi %arg0, %c1_i32_11 : i32
    %c128_i32_12 = arith.constant 128 : i32
    %19 = arith.muli %18, %c128_i32_12 : i32
    %20 = arith.cmpi slt, %17, %19 : i32
    %21 = arith.andi %16, %20 : i1
    %c1_i32_13 = arith.constant 1 : i32
    %22 = arith.addi %arg1, %c1_i32_13 : i32
    %c128_i32_14 = arith.constant 128 : i32
    %23 = arith.muli %22, %c128_i32_14 : i32
    %c16_i32 = arith.constant 16 : i32
    %24 = arith.cmpi sgt, %23, %c16_i32 : i32
    %25 = arith.ori %21, %24 : i1
    %26 = arith.extui %25 : i1 to i32
    %c0_i32_15 = arith.constant 0 : i32
    %27 = arith.cmpi ne, %26, %c0_i32_15 : i32
    scf.if %27 {
      %c128_i32_19 = arith.constant 128 : i32
      %34 = arith.muli %arg1, %c128_i32_19 : i32
      %35 = tpu.iota {dimensions = array<i32: 0>} : vector<128x1xi32>
      %36 = vector.broadcast %34 : i32 to vector<128x1xi32>
      %37 = arith.addi %36, %35 : vector<128x1xi32>
      %c128_i32_20 = arith.constant 128 : i32
      %38 = arith.muli %arg0, %c128_i32_20 : i32
      %39 = tpu.iota {dimensions = array<i32: 1>} : vector<1x128xi32>
      %40 = vector.broadcast %38 : i32 to vector<1x128xi32>
      %41 = arith.addi %40, %39 : vector<1x128xi32>
      %c16_i32_21 = arith.constant 16 : i32
      %42 = vector.broadcast %c16_i32_21 : i32 to vector<128x1xi32>
      %43 = arith.cmpi slt, %37, %42 : vector<128x1xi32>
      %44 = vector.broadcast %37 : vector<128x1xi32> to vector<128x128xi32>
      %45 = vector.broadcast %41 : vector<1x128xi32> to vector<128x128xi32>
      %46 = arith.cmpi ne, %44, %45 : vector<128x128xi32>
      %47 = vector.broadcast %43 : vector<128x1xi1> to vector<128x128xi1>
      %48 = arith.andi %46, %47 : vector<128x128xi1>
      %cst_22 = arith.constant -1.000000e+30 : f32
      %49 = vector.shape_cast %43 : vector<128x1xi1> to vector<128x1xi1>
      %50 = vector.broadcast %49 : vector<128x1xi1> to vector<128x128xi1>
      %51 = vector.broadcast %cst_22 : f32 to vector<128x128xf32>
      %52 = arith.select %50, %7, %51 : vector<128x128xi1>, vector<128x128xf32>
      %c0_23 = arith.constant 0 : index
      %c0_24 = arith.constant 0 : index
      %53 = vector.load %arg8[%c0_23, %c0_24] : memref<1x128xf32, #tpu.memory_space<vmem>>, vector<1x128xf32>
      %cst_25 = arith.constant dense<0xFF800000> : vector<128xf32>
      %54 = vector.multi_reduction <maximumf>, %52, %cst_25 [0] : vector<128x128xf32> to vector<128xf32>
      %55 = vector.shape_cast %54 : vector<128xf32> to vector<1x128xf32>
      %56 = arith.maximumf %53, %55 : vector<1x128xf32>
      %57 = arith.subf %53, %56 : vector<1x128xf32>
      %58 = math.exp %57 : vector<1x128xf32>
      %59 = vector.broadcast %56 : vector<1x128xf32> to vector<128x128xf32>
      %60 = arith.subf %7, %59 : vector<128x128xf32>
      %61 = math.exp %60 : vector<128x128xf32>
      %cst_26 = arith.constant 0.000000e+00 : f32
      %62 = vector.broadcast %cst_26 : f32 to vector<128x128xf32>
      %63 = arith.select %48, %61, %62 : vector<128x128xi1>, vector<128x128xf32>
      %64 = arith.andi %12, %48 : vector<128x128xi1>
      %c0_27 = arith.constant 0 : index
      %c0_28 = arith.constant 0 : index
      %65 = vector.load %arg9[%c0_27, %c0_28] : memref<1x128xf32, #tpu.memory_space<vmem>>, vector<1x128xf32>
      %66 = arith.mulf %58, %65 : vector<1x128xf32>
      %cst_29 = arith.constant dense<0.000000e+00> : vector<128xf32>
      %67 = vector.multi_reduction <add>, %63, %cst_29 [0] : vector<128x128xf32> to vector<128xf32>
      %68 = vector.shape_cast %67 : vector<128xf32> to vector<1x128xf32>
      %69 = arith.addf %66, %68 : vector<1x128xf32>
      %c0_30 = arith.constant 0 : index
      %c0_31 = arith.constant 0 : index
      %70 = vector.load %arg9[%c0_30, %c0_31] : memref<1x128xf32, #tpu.memory_space<vmem>>, vector<1x128xf32>
      tpu.vector_store %arg9[%c0_30, %c0_31], %69 {strides = array<i32>} : memref<1x128xf32, #tpu.memory_space<vmem>>, vector<1x128xf32>,
      %c0_32 = arith.constant 0 : index
      %c0_33 = arith.constant 0 : index
      %71 = vector.load %arg10[%c0_32, %c0_33] : memref<1x128xf32, #tpu.memory_space<vmem>>, vector<1x128xf32>
      %cst_34 = arith.constant 0.000000e+00 : f32
      %72 = vector.broadcast %cst_34 : f32 to vector<128x128xf32>
      %73 = arith.select %64, %7, %72 : vector<128x128xi1>, vector<128x128xf32>
      %cst_35 = arith.constant dense<0.000000e+00> : vector<128xf32>
      %74 = vector.multi_reduction <add>, %73, %cst_35 [0] : vector<128x128xf32> to vector<128xf32>
      %75 = vector.shape_cast %74 : vector<128xf32> to vector<1x128xf32>
      %76 = arith.addf %71, %75 : vector<1x128xf32>
      %c0_36 = arith.constant 0 : index
      %c0_37 = arith.constant 0 : index
      %77 = vector.load %arg10[%c0_36, %c0_37] : memref<1x128xf32, #tpu.memory_space<vmem>>, vector<1x128xf32>
      tpu.vector_store %arg10[%c0_36, %c0_37], %76 {strides = array<i32>} : memref<1x128xf32, #tpu.memory_space<vmem>>, vector<1x128xf32>,
      %c0_38 = arith.constant 0 : index
      %c0_39 = arith.constant 0 : index
      %78 = vector.load %arg8[%c0_38, %c0_39] : memref<1x128xf32, #tpu.memory_space<vmem>>, vector<1x128xf32>
      tpu.vector_store %arg8[%c0_38, %c0_39], %56 {strides = array<i32>} : memref<1x128xf32, #tpu.memory_space<vmem>>, vector<1x128xf32>,
    } else {
    }
    %true = arith.constant true
    %28 = arith.xori %25, %true : i1
    %29 = arith.extui %28 : i1 to i32
    %c0_i32_16 = arith.constant 0 : i32
    %30 = arith.cmpi ne, %29, %c0_i32_16 : i32
    scf.if %30 {
      %c0_19 = arith.constant 0 : index
      %c0_20 = arith.constant 0 : index
      %34 = vector.load %arg8[%c0_19, %c0_20] : memref<1x128xf32, #tpu.memory_space<vmem>>, vector<1x128xf32>
      %cst_21 = arith.constant dense<0xFF800000> : vector<128xf32>
      %35 = vector.multi_reduction <maximumf>, %7, %cst_21 [0] : vector<128x128xf32> to vector<128xf32>
      %36 = vector.shape_cast %35 : vector<128xf32> to vector<1x128xf32>
      %37 = arith.maximumf %34, %36 : vector<1x128xf32>
      %38 = arith.subf %34, %37 : vector<1x128xf32>
      %39 = math.exp %38 : vector<1x128xf32>
      %40 = vector.broadcast %37 : vector<1x128xf32> to vector<128x128xf32>
      %41 = arith.subf %7, %40 : vector<128x128xf32>
      %42 = math.exp %41 : vector<128x128xf32>
      %c0_22 = arith.constant 0 : index
      %c0_23 = arith.constant 0 : index
      %43 = vector.load %arg9[%c0_22, %c0_23] : memref<1x128xf32, #tpu.memory_space<vmem>>, vector<1x128xf32>
      %44 = arith.mulf %39, %43 : vector<1x128xf32>
      %cst_24 = arith.constant dense<0.000000e+00> : vector<128xf32>
      %45 = vector.multi_reduction <add>, %42, %cst_24 [0] : vector<128x128xf32> to vector<128xf32>
      %46 = vector.shape_cast %45 : vector<128xf32> to vector<1x128xf32>
      %47 = arith.addf %44, %46 : vector<1x128xf32>
      %c0_25 = arith.constant 0 : index
      %c0_26 = arith.constant 0 : index
      %48 = vector.load %arg9[%c0_25, %c0_26] : memref<1x128xf32, #tpu.memory_space<vmem>>, vector<1x128xf32>
      tpu.vector_store %arg9[%c0_25, %c0_26], %47 {strides = array<i32>} : memref<1x128xf32, #tpu.memory_space<vmem>>, vector<1x128xf32>,
      %c0_27 = arith.constant 0 : index
      %c0_28 = arith.constant 0 : index
      %49 = vector.load %arg10[%c0_27, %c0_28] : memref<1x128xf32, #tpu.memory_space<vmem>>, vector<1x128xf32>
      %cst_29 = arith.constant 0.000000e+00 : f32
      %50 = vector.broadcast %cst_29 : f32 to vector<128x128xf32>
      %51 = arith.select %12, %7, %50 : vector<128x128xi1>, vector<128x128xf32>
      %cst_30 = arith.constant dense<0.000000e+00> : vector<128xf32>
      %52 = vector.multi_reduction <add>, %51, %cst_30 [0] : vector<128x128xf32> to vector<128xf32>
      %53 = vector.shape_cast %52 : vector<128xf32> to vector<1x128xf32>
      %54 = arith.addf %49, %53 : vector<1x128xf32>
      %c0_31 = arith.constant 0 : index
      %c0_32 = arith.constant 0 : index
      %55 = vector.load %arg10[%c0_31, %c0_32] : memref<1x128xf32, #tpu.memory_space<vmem>>, vector<1x128xf32>
      tpu.vector_store %arg10[%c0_31, %c0_32], %54 {strides = array<i32>} : memref<1x128xf32, #tpu.memory_space<vmem>>, vector<1x128xf32>,
      %c0_33 = arith.constant 0 : index
      %c0_34 = arith.constant 0 : index
      %56 = vector.load %arg8[%c0_33, %c0_34] : memref<1x128xf32, #tpu.memory_space<vmem>>, vector<1x128xf32>
      tpu.vector_store %arg8[%c0_33, %c0_34], %37 {strides = array<i32>} : memref<1x128xf32, #tpu.memory_space<vmem>>, vector<1x128xf32>,
    } else {
    }
    %c0_i32_17 = arith.constant 0 : i32
    %31 = arith.cmpi eq, %arg1, %c0_i32_17 : i32
    %32 = arith.extui %31 : i1 to i32
    %c0_i32_18 = arith.constant 0 : i32
    %33 = arith.cmpi ne, %32, %c0_i32_18 : i32
    scf.if %33 {
      %c0_19 = arith.constant 0 : index
      %c0_20 = arith.constant 0 : index
      %34 = vector.load %arg10[%c0_19, %c0_20] : memref<1x128xf32, #tpu.memory_space<vmem>>, vector<1x128xf32>
      %c0_21 = arith.constant 0 : index
      %c0_22 = arith.constant 0 : index
      %35 = vector.load %arg6[%c0_21, %c0_22] : memref<1x128xf32, #tpu.memory_space<vmem>>, vector<1x128xf32>
      %36 = arith.mulf %34, %35 : vector<1x128xf32>
      %c0_23 = arith.constant 0 : index
      %c0_24 = arith.constant 0 : index
      %37 = vector.load %arg8[%c0_23, %c0_24] : memref<1x128xf32, #tpu.memory_space<vmem>>, vector<1x128xf32>
      %38 = arith.subf %36, %37 : vector<1x128xf32>
      %c0_25 = arith.constant 0 : index
      %c0_26 = arith.constant 0 : index
      %39 = vector.load %arg9[%c0_25, %c0_26] : memref<1x128xf32, #tpu.memory_space<vmem>>, vector<1x128xf32>
      %40 = math.log %39 : vector<1x128xf32>
      %41 = arith.subf %38, %40 : vector<1x128xf32>
      %cst_27 = arith.constant -1.000000e+00 : f32
      %42 = vector.broadcast %cst_27 : f32 to vector<1x128xf32>
      %43 = arith.mulf %42, %41 : vector<1x128xf32>
      %c0_28 = arith.constant 0 : index
      %c0_29 = arith.constant 0 : index
      %44 = vector.load %arg7[%c0_28, %c0_29] : memref<1x128xf32, #tpu.memory_space<vmem>>, vector<1x128xf32>
      tpu.vector_store %arg7[%c0_28, %c0_29], %43 {strides = array<i32>} : memref<1x128xf32, #tpu.memory_space<vmem>>, vector<1x128xf32>,
    } else {
    }
    return
  }
  func.func @transform_0(%arg0: i32, %arg1: i32) -> (i32, i32) {
    %c0_i32 = arith.constant 0 : i32
    %c0_i32_0 = arith.constant 0 : i32
    return %c0_i32, %arg0 : i32, i32
  }
  func.func @transform_1(%arg0: i32, %arg1: i32) -> (i32, i32) {
    %c0_i32 = arith.constant 0 : i32
    %c0_i32_0 = arith.constant 0 : i32
    return %arg1, %c0_i32 : i32, i32
  }
  func.func @transform_2(%arg0: i32, %arg1: i32) -> (i32, i32) {
    %c0_i32 = arith.constant 0 : i32
    %c0_i32_0 = arith.constant 0 : i32
    return %c0_i32, %arg0 : i32, i32
  }
  func.func @transform_3(%arg0: i32, %arg1: i32) -> (i32, i32) {
    %c0_i32 = arith.constant 0 : i32
    %c0_i32_0 = arith.constant 0 : i32
    return %arg1, %c0_i32 : i32, i32
  }
  func.func @transform_4(%arg0: i32, %arg1: i32) -> (i32, i32) {
    %c0_i32 = arith.constant 0 : i32
    %c0_i32_0 = arith.constant 0 : i32
    return %c0_i32, %arg0 : i32, i32
  }
  func.func @transform_5(%arg0: i32, %arg1: i32) -> (i32, i32) {
    %c0_i32 = arith.constant 0 : i32
    %c0_i32_0 = arith.constant 0 : i32
    return %c0_i32, %arg0 : i32, i32
  }
}

</mosaic_0001>

<llo_original>
// kernel: tpu_custom_call.1
$region0: #{tpu_custom_call.1}
  #allocation0 [shape = 'u32[]', space=smem, size = 0x4, offset = 0x4, fixed_abs, tag = 'smem constant byte address 0x4 - core index']
  #allocation1 [shape = 'u32[144,128]{1,0:T(1,128)}', space=vmem, size = 0x12000, scoped, tag = 'internal scratch']
  #allocation2 [shape = 'f32[1,128]{1,0:T(1,128)}', space=vmem, size = 0x200, scoped, tag = 'scratch operand']
  #allocation3 [shape = 'f32[1,128]{1,0:T(1,128)}', space=vmem, size = 0x200, scoped, tag = 'scratch operand']
  #allocation4 [shape = 'f32[1,128]{1,0:T(1,128)}', space=vmem, size = 0x200, scoped, tag = 'scratch operand']
  %s0 = inlined_call_operand.vmem [shape: bf16[128,128], index: 0, kind: input, shape index: {}]
  %s1 = inlined_call_operand.vmem [shape: bf16[128,128], index: 1, kind: input, shape index: {}]
  %s2 = inlined_call_operand.vmem [shape: s32[1,128], index: 2, kind: input, shape index: {}]
  %s3 = inlined_call_operand.vmem [shape: s32[128,1], index: 3, kind: input, shape index: {}]
  %s4 = inlined_call_operand.vmem [shape: f32[1,128], index: 4, kind: input, shape index: {}]
  %s5 = inlined_call_operand.hbm [shape: f32[1,128], index: 5, kind: output, shape index: {}]
  %s6 = sld [smem:[#allocation0]]
  $region46: #{tpu_custom_call.1} parent=0
    _
  %s8 = ssub.s32 1, %s6
  %s9 = scalar_select 0, %s8, %s6
  $region1: #{tpu_custom_call.1} parent=0
    #allocation5 [shape = 'u8[512]{0}', space=vmem, size = 0x400, scoped, tag = 'output window, operand 0, single buffered']
    #allocation6 [shape = 's32[1]{0}', space=sflag, size = 0x4, scoped, tag = 'scoped memory for tpu_custom_call.1']
    %10 = vsyncpa [#allocation6], 0
    // Predicated region
    $region2: #{tpu_custom_call.1} parent=1 // pred_check
      _
    $region3: #{tpu_custom_call.1} parent=1 // pred_check_branch
      %12 = sbr.rel (0) target = $region5
    $region4: #{tpu_custom_call.1} parent=1 // pred_region
      _
    $region5: #{tpu_custom_call.1} parent=1 // pred_fallthru
      _
    // Predicated region
    $region6: #{tpu_custom_call.1} parent=1 // pred_check
      _
    $region7: #{tpu_custom_call.1} parent=1 // pred_check_branch
      %14 = sbr.rel (0) target = $region9
    $region8: #{tpu_custom_call.1} parent=1 // pred_region
      _
    $region9: #{tpu_custom_call.1} parent=1 // pred_fallthru
      _
    // Predicated region
    $region10: #{tpu_custom_call.1} parent=1 // pred_check
      _
    $region11: #{tpu_custom_call.1} parent=1 // pred_check_branch
      %16 = sbr.rel (0) target = $region13
    $region12: #{tpu_custom_call.1} parent=1 // pred_region
      _
    $region13: #{tpu_custom_call.1} parent=1 // pred_fallthru
      _
    // Predicated region
    $region14: #{tpu_custom_call.1} parent=1 // pred_check
      _
    $region15: #{tpu_custom_call.1} parent=1 // pred_check_branch
      %18 = sbr.rel (0) target = $region17
    $region16: #{tpu_custom_call.1} parent=1 // pred_region
      _
    $region17: #{tpu_custom_call.1} parent=1 // pred_fallthru
      _
    // Predicated region
    $region18: #{tpu_custom_call.1} parent=1 // pred_check
      _
    $region19: #{tpu_custom_call.1} parent=1 // pred_check_branch
      %20 = sbr.rel (0) target = $region21
    $region20: #{tpu_custom_call.1} parent=1 // pred_region
      _
    $region21: #{tpu_custom_call.1} parent=1 // pred_fallthru
      _
    %p22 = scmp.eq.s32.totalorder 0, 0
    // Predicated region
    $region22: #{tpu_custom_call.1} parent=1 // pred_check
      %p23 = pneg %p22
    $region23: #{tpu_custom_call.1} parent=1 // pred_check_branch
      %25 = sbr.rel (%p23) target = $region25
    $region24: #{tpu_custom_call.1} parent=1 // pred_region
      %26 = vst [vmem:[#allocation2] sm:$0x1] -1e+30
      %27 = vst [vmem:[#allocation3] sm:$0x1] 0.0
      %28 = vst [vmem:[#allocation4] sm:$0x1] 0.0
    $region25: #{tpu_custom_call.1} parent=1 // pred_fallthru
      _
    %v29 = vld [vmem:[%s1] sm:$0xf]
    %v30 = vld [vmem:[%s1 + $0x4] sm:$0xf]
    %v31 = vld [vmem:[%s1 + $0x8] sm:$0xf]
    %v32 = vld [vmem:[%s1 + $0xc] sm:$0xf]
    %v33 = vld [vmem:[%s1 + $0x10] sm:$0xf]
    %v34 = vld [vmem:[%s1 + $0x14] sm:$0xf]
    %v35 = vld [vmem:[%s1 + $0x18] sm:$0xf]
    %v36 = vld [vmem:[%s1 + $0x1c] sm:$0xf]
    %v37 = vld [vmem:[%s1 + $0x20] sm:$0xf]
    %v38 = vld [vmem:[%s1 + $0x24] sm:$0xf]
    %v39 = vld [vmem:[%s1 + $0x28] sm:$0xf]
    %v40 = vld [vmem:[%s1 + $0x2c] sm:$0xf]
    %v41 = vld [vmem:[%s1 + $0x30] sm:$0xf]
    %v42 = vld [vmem:[%s1 + $0x34] sm:$0xf]
    %v43 = vld [vmem:[%s1 + $0x38] sm:$0xf]
    %v44 = vld [vmem:[%s1 + $0x3c] sm:$0xf]
    %v45 = vld [vmem:[%s0] sm:$0xf]
    %v46 = vld [vmem:[%s0 + $0x4] sm:$0xf]
    %v47 = vld [vmem:[%s0 + $0x8] sm:$0xf]
    %v48 = vld [vmem:[%s0 + $0xc] sm:$0xf]
    %v49 = vld [vmem:[%s0 + $0x10] sm:$0xf]
    %v50 = vld [vmem:[%s0 + $0x14] sm:$0xf]
    %v51 = vld [vmem:[%s0 + $0x18] sm:$0xf]
    %v52 = vld [vmem:[%s0 + $0x1c] sm:$0xf]
    %v53 = vld [vmem:[%s0 + $0x20] sm:$0xf]
    %v54 = vld [vmem:[%s0 + $0x24] sm:$0xf]
    %v55 = vld [vmem:[%s0 + $0x28] sm:$0xf]
    %v56 = vld [vmem:[%s0 + $0x2c] sm:$0xf]
    %v57 = vld [vmem:[%s0 + $0x30] sm:$0xf]
    %v58 = vld [vmem:[%s0 + $0x34] sm:$0xf]
    %v59 = vld [vmem:[%s0 + $0x38] sm:$0xf]
    %v60 = vld [vmem:[%s0 + $0x3c] sm:$0xf]
    %v77 = vunpack.c.l.b16 %v29
    %v78 = vunpack.c.l.b16 %v30
    %v79 = vunpack.c.l.b16 %v31
    %v80 = vunpack.c.l.b16 %v32
    %v81 = vunpack.c.l.b16 %v33
    %v82 = vunpack.c.l.b16 %v34
    %v83 = vunpack.c.l.b16 %v35
    %v84 = vunpack.c.l.b16 %v36
    %v85 = vunpack.c.l.b16 %v37
    %v86 = vunpack.c.l.b16 %v38
    %v87 = vunpack.c.l.b16 %v39
    %v88 = vunpack.c.l.b16 %v40
    %v89 = vunpack.c.l.b16 %v41
    %v90 = vunpack.c.l.b16 %v42
    %v91 = vunpack.c.l.b16 %v43
    %v92 = vunpack.c.l.b16 %v44
    %v93 = vpack.c.b16 %v78, %v77
    %v94 = vpack.c.b16 %v80, %v79
    %v95 = vpack.c.b16 %v82, %v81
    %v96 = vpack.c.b16 %v84, %v83
    %v97 = vpack.c.b16 %v86, %v85
    %v98 = vpack.c.b16 %v88, %v87
    %v99 = vpack.c.b16 %v90, %v89
    %v100 = vpack.c.b16 %v92, %v91
    %v125 = vunpack.c.l.b16 %v45
    %v126 = vunpack.c.l.b16 %v46
    %v127 = vunpack.c.l.b16 %v47
    %v128 = vunpack.c.l.b16 %v48
    %v129 = vunpack.c.l.b16 %v49
    %v130 = vunpack.c.l.b16 %v50
    %v131 = vunpack.c.l.b16 %v51
    %v132 = vunpack.c.l.b16 %v52
    %v133 = vunpack.c.l.b16 %v53
    %v134 = vunpack.c.l.b16 %v54
    %v135 = vunpack.c.l.b16 %v55
    %v136 = vunpack.c.l.b16 %v56
    %v137 = vunpack.c.l.b16 %v57
    %v138 = vunpack.c.l.b16 %v58
    %v139 = vunpack.c.l.b16 %v59
    %v140 = vunpack.c.l.b16 %v60
    %v141 = vpack.c.b16 %v126, %v125
    %v142 = vpack.c.b16 %v128, %v127
    %v143 = vpack.c.b16 %v130, %v129
    %v144 = vpack.c.b16 %v132, %v131
    %v145 = vpack.c.b16 %v134, %v133
    %v146 = vpack.c.b16 %v136, %v135
    %v147 = vpack.c.b16 %v138, %v137
    %v148 = vpack.c.b16 %v140, %v139
    %157 = vmatprep.subr.bf16.mxu0 0
    %158 = vmatpush1.bf16.msra.mxu0 %v141
    %159 = vmatprep.subr.bf16.mxu0 0
    %160 = vmatpush1.bf16.msra.mxu0 %v142
    %161 = vmatprep.subr.bf16.mxu0 0
    %162 = vmatpush1.bf16.msra.mxu0 %v143
    %163 = vmatprep.subr.bf16.mxu0 0
    %164 = vmatpush1.bf16.msra.mxu0 %v144
    %165 = vmatprep.subr.bf16.mxu0 0
    %166 = vmatpush1.bf16.msra.mxu0 %v145
    %167 = vmatprep.subr.bf16.mxu0 0
    %168 = vmatpush1.bf16.msra.mxu0 %v146
    %169 = vmatprep.subr.bf16.mxu0 0
    %170 = vmatpush1.bf16.msra.mxu0 %v147
    %171 = vmatprep.subr.bf16.mxu0 0
    %172 = vmatpush1.bf16.msra.mxu0 %v148
    %173 = vmatprep.subr.bf16.mxu0 0
    %174 = vmatpush1.bf16.msra.mxu0 0
    %175 = vmatprep.subr.bf16.mxu0 0
    %176 = vmatpush1.bf16.msra.mxu0 0
    %177 = vmatprep.subr.bf16.mxu0 0
    %178 = vmatpush1.bf16.msra.mxu0 0
    %179 = vmatprep.subr.bf16.mxu0 0
    %180 = vmatpush1.bf16.msra.mxu0 0
    %181 = vmatprep.subr.bf16.mxu0 0
    %182 = vmatpush1.bf16.msra.mxu0 0
    %183 = vmatprep.subr.bf16.mxu0 0
    %184 = vmatpush1.bf16.msra.mxu0 0
    %185 = vmatprep.subr.bf16.mxu0 0
    %186 = vmatpush1.bf16.msra.mxu0 0
    %187 = vmatprep.subr.bf16.mxu0 0
    %188 = vmatpush1.bf16.msra.mxu0 0
    %189 = vmatprep.mubr.bf16.mxu0 0
    %190 = vmatmul.mubr.bf16.gmra.mrb[0].mxu0 %v93
    %v191 = vpop.f32.mrb[0].mxu0
    %v192 = vadd.f32 0.0, %v191
    %v193 = vpop.f32.mrb[0].mxu0
    %v194 = vpop.f32.mrb[0].mxu0
    %v195 = vadd.f32 0.0, %v194
    %v196 = vpop.f32.mrb[0].mxu0
    %197 = vmatprep.mubr.bf16.mxu0 0
    %198 = vmatmul.mubr.bf16.gmra.mrb[0].mxu0 %v94
    %v199 = vpop.f32.mrb[0].mxu0
    %v200 = vadd.f32 0.0, %v199
    %v201 = vpop.f32.mrb[0].mxu0
    %v202 = vpop.f32.mrb[0].mxu0
    %v203 = vadd.f32 0.0, %v202
    %v204 = vpop.f32.mrb[0].mxu0
    %205 = vmatprep.mubr.bf16.mxu0 0
    %206 = vmatmul.mubr.bf16.gmra.mrb[0].mxu0 %v95
    %v207 = vpop.f32.mrb[0].mxu0
    %v208 = vadd.f32 0.0, %v207
    %v209 = vpop.f32.mrb[0].mxu0
    %v210 = vpop.f32.mrb[0].mxu0
    %v211 = vadd.f32 0.0, %v210
    %v212 = vpop.f32.mrb[0].mxu0
    %213 = vmatprep.mubr.bf16.mxu0 0
    %214 = vmatmul.mubr.bf16.gmra.mrb[0].mxu0 %v96
    %v215 = vpop.f32.mrb[0].mxu0
    %v216 = vadd.f32 0.0, %v215
    %v217 = vpop.f32.mrb[0].mxu0
    %v218 = vpop.f32.mrb[0].mxu0
    %v219 = vadd.f32 0.0, %v218
    %v220 = vpop.f32.mrb[0].mxu0
    %221 = vmatprep.mubr.bf16.mxu0 0
    %222 = vmatmul.mubr.bf16.gmra.mrb[0].mxu0 %v97
    %v223 = vpop.f32.mrb[0].mxu0
    %v224 = vadd.f32 0.0, %v223
    %v225 = vpop.f32.mrb[0].mxu0
    %v226 = vpop.f32.mrb[0].mxu0
    %v227 = vadd.f32 0.0, %v226
    %v228 = vpop.f32.mrb[0].mxu0
    %229 = vmatprep.mubr.bf16.mxu0 0
    %230 = vmatmul.mubr.bf16.gmra.mrb[0].mxu0 %v98
    %v231 = vpop.f32.mrb[0].mxu0
    %v232 = vadd.f32 0.0, %v231
    %v233 = vpop.f32.mrb[0].mxu0
    %v234 = vpop.f32.mrb[0].mxu0
    %v235 = vadd.f32 0.0, %v234
    %v236 = vpop.f32.mrb[0].mxu0
    %237 = vmatprep.mubr.bf16.mxu0 0
    %238 = vmatmul.mubr.bf16.gmra.mrb[0].mxu0 %v99
    %v239 = vpop.f32.mrb[0].mxu0
    %v240 = vadd.f32 0.0, %v239
    %v241 = vpop.f32.mrb[0].mxu0
    %v242 = vpop.f32.mrb[0].mxu0
    %v243 = vadd.f32 0.0, %v242
    %v244 = vpop.f32.mrb[0].mxu0
    %245 = vmatprep.mubr.bf16.mxu0 0
    %246 = vmatmul.mubr.bf16.gmra.mrb[0].mxu0 %v100
    %v247 = vpop.f32.mrb[0].mxu0
    %v248 = vadd.f32 0.0, %v247
    %v249 = vpop.f32.mrb[0].mxu0
    %v250 = vpop.f32.mrb[0].mxu0
    %v251 = vadd.f32 0.0, %v250
    %v252 = vpop.f32.mrb[0].mxu0
    %253 = vdwg.mxu0
    %v254 = vmul.f32 %v192, 14.285714
    %v255 = vmul.f32 %v195, 14.285714
    %v256 = vmul.f32 %v200, 14.285714
    %v257 = vmul.f32 %v203, 14.285714
    %v258 = vmul.f32 %v208, 14.285714
    %v259 = vmul.f32 %v211, 14.285714
    %v260 = vmul.f32 %v216, 14.285714
    %v261 = vmul.f32 %v219, 14.285714
    %v262 = vmul.f32 %v224, 14.285714
    %v263 = vmul.f32 %v227, 14.285714
    %v264 = vmul.f32 %v232, 14.285714
    %v265 = vmul.f32 %v235, 14.285714
    %v266 = vmul.f32 %v240, 14.285714
    %v267 = vmul.f32 %v243, 14.285714
    %v268 = vmul.f32 %v248, 14.285714
    %v269 = vmul.f32 %v251, 14.285714
    %v270 = vld [vmem:[%s3] sm:$0xff]
    %v271 = vld [vmem:[%s3 + $0x8] sm:$0xff]
    %v272 = vld [vmem:[%s3 + $0x10] sm:$0xff]
    %v273 = vld [vmem:[%s3 + $0x18] sm:$0xff]
    %v274 = vld [vmem:[%s3 + $0x20] sm:$0xff]
    %v275 = vld [vmem:[%s3 + $0x28] sm:$0xff]
    %v276 = vld [vmem:[%s3 + $0x30] sm:$0xff]
    %v277 = vld [vmem:[%s3 + $0x38] sm:$0xff]
    %v278 = vld [vmem:[%s3 + $0x40] sm:$0xff]
    %v279 = vld [vmem:[%s3 + $0x48] sm:$0xff]
    %v280 = vld [vmem:[%s3 + $0x50] sm:$0xff]
    %v281 = vld [vmem:[%s3 + $0x58] sm:$0xff]
    %v282 = vld [vmem:[%s3 + $0x60] sm:$0xff]
    %v283 = vld [vmem:[%s3 + $0x68] sm:$0xff]
    %v284 = vld [vmem:[%s3 + $0x70] sm:$0xff]
    %v285 = vld [vmem:[%s3 + $0x78] sm:$0xff]
    %v286 = vld [vmem:[%s2] sm:$0x1]
    %287 = vset.pattern.permute.xlu0 0
    %288 = vperm.xlu0 %287, %v270
    %v289 = vpop.permute.xlu0 %288
    %290 = vset.pattern.permute.xlu0 0
    %291 = vperm.xlu0 %290, %v271
    %v292 = vpop.permute.xlu0 %291
    %293 = vset.pattern.permute.xlu0 0
    %294 = vperm.xlu0 %293, %v272
    %v295 = vpop.permute.xlu0 %294
    %296 = vset.pattern.permute.xlu0 0
    %297 = vperm.xlu0 %296, %v273
    %v298 = vpop.permute.xlu0 %297
    %299 = vset.pattern.permute.xlu0 0
    %300 = vperm.xlu0 %299, %v274
    %v301 = vpop.permute.xlu0 %300
    %302 = vset.pattern.permute.xlu0 0
    %303 = vperm.xlu0 %302, %v275
    %v304 = vpop.permute.xlu0 %303
    %305 = vset.pattern.permute.xlu0 0
    %306 = vperm.xlu0 %305, %v276
    %v307 = vpop.permute.xlu0 %306
    %308 = vset.pattern.permute.xlu0 0
    %309 = vperm.xlu0 %308, %v277
    %v310 = vpop.permute.xlu0 %309
    %311 = vset.pattern.permute.xlu0 0
    %312 = vperm.xlu0 %311, %v278
    %v313 = vpop.permute.xlu0 %312
    %314 = vset.pattern.permute.xlu0 0
    %315 = vperm.xlu0 %314, %v279
    %v316 = vpop.permute.xlu0 %315
    %317 = vset.pattern.permute.xlu0 0
    %318 = vperm.xlu0 %317, %v280
    %v319 = vpop.permute.xlu0 %318
    %320 = vset.pattern.permute.xlu0 0
    %321 = vperm.xlu0 %320, %v281
    %v322 = vpop.permute.xlu0 %321
    %323 = vset.pattern.permute.xlu0 0
    %324 = vperm.xlu0 %323, %v282
    %v325 = vpop.permute.xlu0 %324
    %326 = vset.pattern.permute.xlu0 0
    %327 = vperm.xlu0 %326, %v283
    %v328 = vpop.permute.xlu0 %327
    %329 = vset.pattern.permute.xlu0 0
    %330 = vperm.xlu0 %329, %v284
    %v331 = vpop.permute.xlu0 %330
    %332 = vset.pattern.permute.xlu0 0
    %333 = vperm.xlu0 %332, %v285
    %v334 = vpop.permute.xlu0 %333
    %v335 = vlaneseq
    %v336 = vshrl.u32 %v335, 7
    %v337 = vsub.s32 0, %v336
    %v338 = vrot.slane %v286, %v337
    %vm339 = vcmp.eq.s32.totalorder %v289, %v338
    %vm340 = vcmp.eq.s32.totalorder %v292, %v338
    %vm341 = vcmp.eq.s32.totalorder %v295, %v338
    %vm342 = vcmp.eq.s32.totalorder %v298, %v338
    %vm343 = vcmp.eq.s32.totalorder %v301, %v338
    %vm344 = vcmp.eq.s32.totalorder %v304, %v338
    %vm345 = vcmp.eq.s32.totalorder %v307, %v338
    %vm346 = vcmp.eq.s32.totalorder %v310, %v338
    %vm347 = vcmp.eq.s32.totalorder %v313, %v338
    %vm348 = vcmp.eq.s32.totalorder %v316, %v338
    %vm349 = vcmp.eq.s32.totalorder %v319, %v338
    %vm350 = vcmp.eq.s32.totalorder %v322, %v338
    %vm351 = vcmp.eq.s32.totalorder %v325, %v338
    %vm352 = vcmp.eq.s32.totalorder %v328, %v338
    %vm353 = vcmp.eq.s32.totalorder %v331, %v338
    %vm354 = vcmp.eq.s32.totalorder %v334, %v338
    %s355 = smul.u32 0, 128
    %s356 = sadd.s32 0, 1
    %s357 = smul.u32 %s356, 128
    %p358 = scmp.lt.s32.totalorder %s355, %s357
    %s359 = smul.u32 0, 128
    %s360 = sadd.s32 0, 1
    %s361 = smul.u32 %s360, 128
    %p362 = scmp.lt.s32.totalorder %s359, %s361
    %p363 = pnand %p358, %p362
    %p364 = pneg %p363
    %p365 = scmp.gt.s32.totalorder %s357, 16
    %p366 = por %p364, %p365
    // Predicated region
    $region26: #{tpu_custom_call.1} parent=1 // pred_check
      %p367 = pneg %p366
    $region27: #{tpu_custom_call.1} parent=1 // pred_check_branch
      %369 = sbr.rel (%p367) target = $region29
    $region28: #{tpu_custom_call.1} parent=1 // pred_region
      %v370 = vlaneseq
      %v371 = vshrl.u32 %v370, 7
      %v372 = vadd.s32 %v371, 8
      %v373 = vadd.s32 %v371, 16
      %v374 = vadd.s32 %v371, 24
      %v375 = vadd.s32 %v371, 32
      %v376 = vadd.s32 %v371, 40
      %v377 = vadd.s32 %v371, 48
      %v378 = vadd.s32 %v371, 56
      %v379 = vadd.s32 %v371, 64
      %v380 = vadd.s32 %v371, 72
      %v381 = vadd.s32 %v371, 80
      %v382 = vadd.s32 %v371, 88
      %v383 = vadd.s32 %v371, 96
      %v384 = vadd.s32 %v371, 104
      %v385 = vadd.s32 %v371, 112
      %v386 = vadd.s32 %v371, 120
      %v387 = vstv %s359
      %v388 = vadd.s32 %v387, %v371
      %v389 = vadd.s32 %v387, %v372
      %v390 = vadd.s32 %v387, %v373
      %v391 = vadd.s32 %v387, %v374
      %v392 = vadd.s32 %v387, %v375
      %v393 = vadd.s32 %v387, %v376
      %v394 = vadd.s32 %v387, %v377
      %v395 = vadd.s32 %v387, %v378
      %v396 = vadd.s32 %v387, %v379
      %v397 = vadd.s32 %v387, %v380
      %v398 = vadd.s32 %v387, %v381
      %v399 = vadd.s32 %v387, %v382
      %v400 = vadd.s32 %v387, %v383
      %v401 = vadd.s32 %v387, %v384
      %v402 = vadd.s32 %v387, %v385
      %v403 = vadd.s32 %v387, %v386
      %v404 = vlaneseq
      %v405 = vand.u32 %v404, 127
      %v406 = vstv %s355
      %v407 = vadd.s32 %v406, %v405
      %vm408 = vcmp.lt.s32.totalorder %v388, 16
      %vm409 = vcmp.lt.s32.totalorder %v389, 16
      %vm410 = vcmp.lt.s32.totalorder %v390, 16
      %vm411 = vcmp.lt.s32.totalorder %v391, 16
      %vm412 = vcmp.lt.s32.totalorder %v392, 16
      %vm413 = vcmp.lt.s32.totalorder %v393, 16
      %vm414 = vcmp.lt.s32.totalorder %v394, 16
      %vm415 = vcmp.lt.s32.totalorder %v395, 16
      %vm416 = vcmp.lt.s32.totalorder %v396, 16
      %vm417 = vcmp.lt.s32.totalorder %v397, 16
      %vm418 = vcmp.lt.s32.totalorder %v398, 16
      %vm419 = vcmp.lt.s32.totalorder %v399, 16
      %vm420 = vcmp.lt.s32.totalorder %v400, 16
      %vm421 = vcmp.lt.s32.totalorder %v401, 16
      %vm422 = vcmp.lt.s32.totalorder %v402, 16
      %vm423 = vcmp.lt.s32.totalorder %v403, 16
      %vm424 = vcmp.ne.s32.totalorder %v388, %v407
      %vm425 = vcmp.ne.s32.totalorder %v389, %v407
      %vm426 = vcmp.ne.s32.totalorder %v390, %v407
      %vm427 = vcmp.ne.s32.totalorder %v391, %v407
      %vm428 = vcmp.ne.s32.totalorder %v392, %v407
      %vm429 = vcmp.ne.s32.totalorder %v393, %v407
      %vm430 = vcmp.ne.s32.totalorder %v394, %v407
      %vm431 = vcmp.ne.s32.totalorder %v395, %v407
      %vm432 = vcmp.ne.s32.totalorder %v396, %v407
      %vm433 = vcmp.ne.s32.totalorder %v397, %v407
      %vm434 = vcmp.ne.s32.totalorder %v398, %v407
      %vm435 = vcmp.ne.s32.totalorder %v399, %v407
      %vm436 = vcmp.ne.s32.totalorder %v400, %v407
      %vm437 = vcmp.ne.s32.totalorder %v401, %v407
      %vm438 = vcmp.ne.s32.totalorder %v402, %v407
      %vm439 = vcmp.ne.s32.totalorder %v403, %v407
      %v440 = vsel %vm408, 1, 0
      %v441 = vsel %vm409, 1, 0
      %v442 = vsel %vm410, 1, 0
      %v443 = vsel %vm411, 1, 0
      %v444 = vsel %vm412, 1, 0
      %v445 = vsel %vm413, 1, 0
      %v446 = vsel %vm414, 1, 0
      %v447 = vsel %vm415, 1, 0
      %v448 = vsel %vm416, 1, 0
      %v449 = vsel %vm417, 1, 0
      %v450 = vsel %vm418, 1, 0
      %v451 = vsel %vm419, 1, 0
      %v452 = vsel %vm420, 1, 0
      %v453 = vsel %vm421, 1, 0
      %v454 = vsel %vm422, 1, 0
      %v455 = vsel %vm423, 1, 0
      %vm456 = vcmp.eq.s32.totalorder %v440, 1
      %vm457 = vcmp.eq.s32.totalorder %v441, 1
      %vm458 = vcmp.eq.s32.totalorder %v442, 1
      %vm459 = vcmp.eq.s32.totalorder %v443, 1
      %vm460 = vcmp.eq.s32.totalorder %v444, 1
      %vm461 = vcmp.eq.s32.totalorder %v445, 1
      %vm462 = vcmp.eq.s32.totalorder %v446, 1
      %vm463 = vcmp.eq.s32.totalorder %v447, 1
      %vm464 = vcmp.eq.s32.totalorder %v448, 1
      %vm465 = vcmp.eq.s32.totalorder %v449, 1
      %vm466 = vcmp.eq.s32.totalorder %v450, 1
      %vm467 = vcmp.eq.s32.totalorder %v451, 1
      %vm468 = vcmp.eq.s32.totalorder %v452, 1
      %vm469 = vcmp.eq.s32.totalorder %v453, 1
      %vm470 = vcmp.eq.s32.totalorder %v454, 1
      %vm471 = vcmp.eq.s32.totalorder %v455, 1
      %vm472 = vmand %vm424, %vm456
      %vm473 = vmand %vm425, %vm457
      %vm474 = vmand %vm426, %vm458
      %vm475 = vmand %vm427, %vm459
      %vm476 = vmand %vm428, %vm460
      %vm477 = vmand %vm429, %vm461
      %vm478 = vmand %vm430, %vm462
      %vm479 = vmand %vm431, %vm463
      %vm480 = vmand %vm432, %vm464
      %vm481 = vmand %vm433, %vm465
      %vm482 = vmand %vm434, %vm466
      %vm483 = vmand %vm435, %vm467
      %vm484 = vmand %vm436, %vm468
      %vm485 = vmand %vm437, %vm469
      %vm486 = vmand %vm438, %vm470
      %vm487 = vmand %vm439, %vm471
      %v488 = vsel %vm456, %v254, -1e+30
      %v489 = vsel %vm457, %v255, -1e+30
      %v490 = vsel %vm458, %v256, -1e+30
      %v491 = vsel %vm459, %v257, -1e+30
      %v492 = vsel %vm460, %v258, -1e+30
      %v493 = vsel %vm461, %v259, -1e+30
      %v494 = vsel %vm462, %v260, -1e+30
      %v495 = vsel %vm463, %v261, -1e+30
      %v496 = vsel %vm464, %v262, -1e+30
      %v497 = vsel %vm465, %v263, -1e+30
      %v498 = vsel %vm466, %v264, -1e+30
      %v499 = vsel %vm467, %v265, -1e+30
      %v500 = vsel %vm468, %v266, -1e+30
      %v501 = vsel %vm469, %v267, -1e+30
      %v502 = vsel %vm470, %v268, -1e+30
      %v503 = vsel %vm471, %v269, -1e+30
      %v504 = vld [vmem:[#allocation2] sm:$0x1]
      %v505 = vmax.f32 %v488, %v492
      %v506 = vmax.f32 %v489, %v493
      %v507 = vmax.f32 %v490, %v494
      %v508 = vmax.f32 %v491, %v495
      %v509 = vmax.f32 %v505, %v496
      %v510 = vmax.f32 %v506, %v497
      %v511 = vmax.f32 %v507, %v498
      %v512 = vmax.f32 %v508, %v499
      %v513 = vmax.f32 %v509, %v500
      %v514 = vmax.f32 %v510, %v501
      %v515 = vmax.f32 %v511, %v502
      %v516 = vmax.f32 %v512, %v503
      %v517 = vmax.f32 %v513, %v514
      %v518 = vmax.f32 %v515, %v516
      %v519 = vmax.f32 %v517, %v518
      %v520 = vrot.slane %v519, 4
      %v521 = vmax.f32 %v519, %v520
      %v522 = vrot.slane %v521, 2
      %v523 = vmax.f32 %v521, %v522
      %v524 = vrot.slane %v523, 1
      %v525 = vmax.f32 %v523, %v524
      %v526 = vmax.f32 %v504, %v525
      %v527 = vsub.f32 %v504, %v526
      %v528 = vmul.f32 %v527, 1.442695
      %v529 = vpow.pop %v528
      %v531 = vlaneseq
      %v532 = vshrl.u32 %v531, 7
      %v533 = vsub.s32 0, %v532
      %v534 = vrot.slane %v526, %v533
      %v536 = vsub.f32 %v254, %v534
      %v537 = vsub.f32 %v255, %v534
      %v538 = vsub.f32 %v256, %v534
      %v539 = vsub.f32 %v257, %v534
      %v540 = vsub.f32 %v258, %v534
      %v541 = vsub.f32 %v259, %v534
      %v542 = vsub.f32 %v260, %v534
      %v543 = vsub.f32 %v261, %v534
      %v544 = vsub.f32 %v262, %v534
      %v545 = vsub.f32 %v263, %v534
      %v546 = vsub.f32 %v264, %v534
      %v547 = vsub.f32 %v265, %v534
      %v548 = vsub.f32 %v266, %v534
      %v549 = vsub.f32 %v267, %v534
      %v550 = vsub.f32 %v268, %v534
      %v551 = vsub.f32 %v269, %v534
      %v552 = vmul.f32 %v536, 1.442695
      %v553 = vpow.pop %v552
      %v554 = vmul.f32 %v537, 1.442695
      %v555 = vpow.pop %v554
      %v556 = vmul.f32 %v538, 1.442695
      %v557 = vpow.pop %v556
      %v558 = vmul.f32 %v539, 1.442695
      %v559 = vpow.pop %v558
      %v560 = vmul.f32 %v540, 1.442695
      %v561 = vpow.pop %v560
      %v562 = vmul.f32 %v541, 1.442695
      %v563 = vpow.pop %v562
      %v564 = vmul.f32 %v542, 1.442695
      %v565 = vpow.pop %v564
      %v566 = vmul.f32 %v543, 1.442695
      %v567 = vpow.pop %v566
      %v568 = vmul.f32 %v544, 1.442695
      %v569 = vpow.pop %v568
      %v570 = vmul.f32 %v545, 1.442695
      %v571 = vpow.pop %v570
      %v572 = vmul.f32 %v546, 1.442695
      %v573 = vpow.pop %v572
      %v574 = vmul.f32 %v547, 1.442695
      %v575 = vpow.pop %v574
      %v576 = vmul.f32 %v548, 1.442695
      %v577 = vpow.pop %v576
      %v578 = vmul.f32 %v549, 1.442695
      %v579 = vpow.pop %v578
      %v580 = vmul.f32 %v550, 1.442695
      %v581 = vpow.pop %v580
      %v582 = vmul.f32 %v551, 1.442695
      %v583 = vpow.pop %v582
      %v584 = vsel %vm472, %v553, 0.0
      %v585 = vsel %vm473, %v555, 0.0
      %v586 = vsel %vm474, %v557, 0.0
      %v587 = vsel %vm475, %v559, 0.0
      %v588 = vsel %vm476, %v561, 0.0
      %v589 = vsel %vm477, %v563, 0.0
      %v590 = vsel %vm478, %v565, 0.0
      %v591 = vsel %vm479, %v567, 0.0
      %v592 = vsel %vm480, %v569, 0.0
      %v593 = vsel %vm481, %v571, 0.0
      %v594 = vsel %vm482, %v573, 0.0
      %v595 = vsel %vm483, %v575, 0.0
      %v596 = vsel %vm484, %v577, 0.0
      %v597 = vsel %vm485, %v579, 0.0
      %v598 = vsel %vm486, %v581, 0.0
      %v599 = vsel %vm487, %v583, 0.0
      %vm600 = vmand %vm339, %vm472
      %vm601 = vmand %vm340, %vm473
      %vm602 = vmand %vm341, %vm474
      %vm603 = vmand %vm342, %vm475
      %vm604 = vmand %vm343, %vm476
      %vm605 = vmand %vm344, %vm477
      %vm606 = vmand %vm345, %vm478
      %vm607 = vmand %vm346, %vm479
      %vm608 = vmand %vm347, %vm480
      %vm609 = vmand %vm348, %vm481
      %vm610 = vmand %vm349, %vm482
      %vm611 = vmand %vm350, %vm483
      %vm612 = vmand %vm351, %vm484
      %vm613 = vmand %vm352, %vm485
      %vm614 = vmand %vm353, %vm486
      %vm615 = vmand %vm354, %vm487
      %v616 = vld [vmem:[#allocation3] sm:$0x1]
      %v617 = vmul.f32 %v529, %v616
      %v618 = vadd.f32 %v584, %v585
      %v619 = vadd.f32 %v618, %v586
      %v620 = vadd.f32 %v619, %v587
      %v621 = vadd.f32 %v620, %v588
      %v622 = vadd.f32 %v621, %v589
      %v623 = vadd.f32 %v622, %v590
      %v624 = vadd.f32 %v623, %v591
      %v625 = vadd.f32 %v624, %v592
      %v626 = vadd.f32 %v625, %v593
      %v627 = vadd.f32 %v626, %v594
      %v628 = vadd.f32 %v627, %v595
      %v629 = vadd.f32 %v628, %v596
      %v630 = vadd.f32 %v629, %v597
      %v631 = vadd.f32 %v630, %v598
      %v632 = vadd.f32 %v631, %v599
      %v633 = vrot.slane %v632, 4
      %v634 = vadd.f32 %v632, %v633
      %v635 = vrot.slane %v634, 2
      %v636 = vadd.f32 %v634, %v635
      %v637 = vrot.slane %v636, 1
      %v638 = vadd.f32 %v636, %v637
      %v639 = vadd.f32 %v617, %v638
      %640 = vst [vmem:[#allocation3] sm:$0x1] %v639
      %v641 = vld [vmem:[#allocation4] sm:$0x1]
      %v642 = vsel %vm600, %v254, 0.0
      %v643 = vsel %vm601, %v255, 0.0
      %v644 = vsel %vm602, %v256, 0.0
      %v645 = vsel %vm603, %v257, 0.0
      %v646 = vsel %vm604, %v258, 0.0
      %v647 = vsel %vm605, %v259, 0.0
      %v648 = vsel %vm606, %v260, 0.0
      %v649 = vsel %vm607, %v261, 0.0
      %v650 = vsel %vm608, %v262, 0.0
      %v651 = vsel %vm609, %v263, 0.0
      %v652 = vsel %vm610, %v264, 0.0
      %v653 = vsel %vm611, %v265, 0.0
      %v654 = vsel %vm612, %v266, 0.0
      %v655 = vsel %vm613, %v267, 0.0
      %v656 = vsel %vm614, %v268, 0.0
      %v657 = vsel %vm615, %v269, 0.0
      %v658 = vadd.f32 %v642, %v643
      %v659 = vadd.f32 %v658, %v644
      %v660 = vadd.f32 %v659, %v645
      %v661 = vadd.f32 %v660, %v646
      %v662 = vadd.f32 %v661, %v647
      %v663 = vadd.f32 %v662, %v648
      %v664 = vadd.f32 %v663, %v649
      %v665 = vadd.f32 %v664, %v650
      %v666 = vadd.f32 %v665, %v651
      %v667 = vadd.f32 %v666, %v652
      %v668 = vadd.f32 %v667, %v653
      %v669 = vadd.f32 %v668, %v654
      %v670 = vadd.f32 %v669, %v655
      %v671 = vadd.f32 %v670, %v656
      %v672 = vadd.f32 %v671, %v657
      %v673 = vrot.slane %v672, 4
      %v674 = vadd.f32 %v672, %v673
      %v675 = vrot.slane %v674, 2
      %v676 = vadd.f32 %v674, %v675
      %v677 = vrot.slane %v676, 1
      %v678 = vadd.f32 %v676, %v677
      %v679 = vadd.f32 %v641, %v678
      %680 = vst [vmem:[#allocation4] sm:$0x1] %v679
      %681 = vst [vmem:[#allocation2] sm:$0x1] %v526
    $region29: #{tpu_custom_call.1} parent=1 // pred_fallthru
      _
    %p682 = pneg %p366
    // Predicated region
    $region30: #{tpu_custom_call.1} parent=1 // pred_check
      _
    $region31: #{tpu_custom_call.1} parent=1 // pred_check_branch
      %684 = sbr.rel (%p366) target = $region33
    $region32: #{tpu_custom_call.1} parent=1 // pred_region
      %v685 = vld [vmem:[#allocation2] sm:$0x1]
      %v686 = vmax.f32 %v254, %v258
      %v687 = vmax.f32 %v255, %v259
      %v688 = vmax.f32 %v256, %v260
      %v689 = vmax.f32 %v257, %v261
      %v690 = vmax.f32 %v686, %v262
      %v691 = vmax.f32 %v687, %v263
      %v692 = vmax.f32 %v688, %v264
      %v693 = vmax.f32 %v689, %v265
      %v694 = vmax.f32 %v690, %v266
      %v695 = vmax.f32 %v691, %v267
      %v696 = vmax.f32 %v692, %v268
      %v697 = vmax.f32 %v693, %v269
      %v698 = vmax.f32 %v694, %v695
      %v699 = vmax.f32 %v696, %v697
      %v700 = vmax.f32 %v698, %v699
      %v701 = vrot.slane %v700, 4
      %v702 = vmax.f32 %v700, %v701
      %v703 = vrot.slane %v702, 2
      %v704 = vmax.f32 %v702, %v703
      %v705 = vrot.slane %v704, 1
      %v706 = vmax.f32 %v704, %v705
      %v707 = vmax.f32 %v685, %v706
      %v708 = vsub.f32 %v685, %v707
      %v709 = vmul.f32 %v708, 1.442695
      %v710 = vpow.pop %v709
      %v712 = vlaneseq
      %v713 = vshrl.u32 %v712, 7
      %v714 = vsub.s32 0, %v713
      %v715 = vrot.slane %v707, %v714
      %v717 = vsub.f32 %v254, %v715
      %v718 = vsub.f32 %v255, %v715
      %v719 = vsub.f32 %v256, %v715
      %v720 = vsub.f32 %v257, %v715
      %v721 = vsub.f32 %v258, %v715
      %v722 = vsub.f32 %v259, %v715
      %v723 = vsub.f32 %v260, %v715
      %v724 = vsub.f32 %v261, %v715
      %v725 = vsub.f32 %v262, %v715
      %v726 = vsub.f32 %v263, %v715
      %v727 = vsub.f32 %v264, %v715
      %v728 = vsub.f32 %v265, %v715
      %v729 = vsub.f32 %v266, %v715
      %v730 = vsub.f32 %v267, %v715
      %v731 = vsub.f32 %v268, %v715
      %v732 = vsub.f32 %v269, %v715
      %v733 = vmul.f32 %v717, 1.442695
      %v734 = vpow.pop %v733
      %v735 = vmul.f32 %v718, 1.442695
      %v736 = vpow.pop %v735
      %v737 = vmul.f32 %v719, 1.442695
      %v738 = vpow.pop %v737
      %v739 = vmul.f32 %v720, 1.442695
      %v740 = vpow.pop %v739
      %v741 = vmul.f32 %v721, 1.442695
      %v742 = vpow.pop %v741
      %v743 = vmul.f32 %v722, 1.442695
      %v744 = vpow.pop %v743
      %v745 = vmul.f32 %v723, 1.442695
      %v746 = vpow.pop %v745
      %v747 = vmul.f32 %v724, 1.442695
      %v748 = vpow.pop %v747
      %v749 = vmul.f32 %v725, 1.442695
      %v750 = vpow.pop %v749
      %v751 = vmul.f32 %v726, 1.442695
      %v752 = vpow.pop %v751
      %v753 = vmul.f32 %v727, 1.442695
      %v754 = vpow.pop %v753
      %v755 = vmul.f32 %v728, 1.442695
      %v756 = vpow.pop %v755
      %v757 = vmul.f32 %v729, 1.442695
      %v758 = vpow.pop %v757
      %v759 = vmul.f32 %v730, 1.442695
      %v760 = vpow.pop %v759
      %v761 = vmul.f32 %v731, 1.442695
      %v762 = vpow.pop %v761
      %v763 = vmul.f32 %v732, 1.442695
      %v764 = vpow.pop %v763
      %v765 = vld [vmem:[#allocation3] sm:$0x1]
      %v766 = vmul.f32 %v710, %v765
      %v767 = vadd.f32 %v734, %v736
      %v768 = vadd.f32 %v767, %v738
      %v769 = vadd.f32 %v768, %v740
      %v770 = vadd.f32 %v769, %v742
      %v771 = vadd.f32 %v770, %v744
      %v772 = vadd.f32 %v771, %v746
      %v773 = vadd.f32 %v772, %v748
      %v774 = vadd.f32 %v773, %v750
      %v775 = vadd.f32 %v774, %v752
      %v776 = vadd.f32 %v775, %v754
      %v777 = vadd.f32 %v776, %v756
      %v778 = vadd.f32 %v777, %v758
      %v779 = vadd.f32 %v778, %v760
      %v780 = vadd.f32 %v779, %v762
      %v781 = vadd.f32 %v780, %v764
      %v782 = vrot.slane %v781, 4
      %v783 = vadd.f32 %v781, %v782
      %v784 = vrot.slane %v783, 2
      %v785 = vadd.f32 %v783, %v784
      %v786 = vrot.slane %v785, 1
      %v787 = vadd.f32 %v785, %v786
      %v788 = vadd.f32 %v766, %v787
      %789 = vst [vmem:[#allocation3] sm:$0x1] %v788
      %v790 = vld [vmem:[#allocation4] sm:$0x1]
      %v791 = vsel %vm339, %v254, 0.0
      %v792 = vsel %vm340, %v255, 0.0
      %v793 = vsel %vm341, %v256, 0.0
      %v794 = vsel %vm342, %v257, 0.0
      %v795 = vsel %vm343, %v258, 0.0
      %v796 = vsel %vm344, %v259, 0.0
      %v797 = vsel %vm345, %v260, 0.0
      %v798 = vsel %vm346, %v261, 0.0
      %v799 = vsel %vm347, %v262, 0.0
      %v800 = vsel %vm348, %v263, 0.0
      %v801 = vsel %vm349, %v264, 0.0
      %v802 = vsel %vm350, %v265, 0.0
      %v803 = vsel %vm351, %v266, 0.0
      %v804 = vsel %vm352, %v267, 0.0
      %v805 = vsel %vm353, %v268, 0.0
      %v806 = vsel %vm354, %v269, 0.0
      %v807 = vadd.f32 %v791, %v792
      %v808 = vadd.f32 %v807, %v793
      %v809 = vadd.f32 %v808, %v794
      %v810 = vadd.f32 %v809, %v795
      %v811 = vadd.f32 %v810, %v796
      %v812 = vadd.f32 %v811, %v797
      %v813 = vadd.f32 %v812, %v798
      %v814 = vadd.f32 %v813, %v799
      %v815 = vadd.f32 %v814, %v800
      %v816 = vadd.f32 %v815, %v801
      %v817 = vadd.f32 %v816, %v802
      %v818 = vadd.f32 %v817, %v803
      %v819 = vadd.f32 %v818, %v804
      %v820 = vadd.f32 %v819, %v805
      %v821 = vadd.f32 %v820, %v806
      %v822 = vrot.slane %v821, 4
      %v823 = vadd.f32 %v821, %v822
      %v824 = vrot.slane %v823, 2
      %v825 = vadd.f32 %v823, %v824
      %v826 = vrot.slane %v825, 1
      %v827 = vadd.f32 %v825, %v826
      %v828 = vadd.f32 %v790, %v827
      %829 = vst [vmem:[#allocation4] sm:$0x1] %v828
      %830 = vst [vmem:[#allocation2] sm:$0x1] %v707
    $region33: #{tpu_custom_call.1} parent=1 // pred_fallthru
      _
    // Predicated region
    $region34: #{tpu_custom_call.1} parent=1 // pred_check
      %p831 = pneg %p22
    $region35: #{tpu_custom_call.1} parent=1 // pred_check_branch
      %833 = sbr.rel (%p831) target = $region37
    $region36: #{tpu_custom_call.1} parent=1 // pred_region
      %v834 = vld [vmem:[#allocation4] sm:$0x1]
      %v835 = vld [vmem:[%s4] sm:$0x1]
      %v836 = vmul.f32 %v834, %v835
      %v837 = vld [vmem:[#allocation2] sm:$0x1]
      %v838 = vsub.f32 %v836, %v837
      %v839 = vld [vmem:[#allocation3] sm:$0x1]
      %v840 = vlog2.pop %v839
      %v841 = vmul.f32 %v840, 0.6931472
      %v842 = vsub.f32 %v838, %v841
      %v843 = vmul.f32 %v842, -1.0
      %844 = vst [vmem:[#allocation5] sm:$0x1] %v843
    $region37: #{tpu_custom_call.1} parent=1 // pred_fallthru
      _
    // Predicated region
    $region38: #{tpu_custom_call.1} parent=1 // pred_check
      _
    $region39: #{tpu_custom_call.1} parent=1 // pred_check_branch
      %846 = sbr.rel (0) target = $region41
    $region40: #{tpu_custom_call.1} parent=1 // pred_region
      %s848 = ssub.s32 16, 16
      %849 = vsyncadd [#allocation6], %s848
      %s851 = sshll.u32 [#allocation5], 4
      %s852 = int_to_ptr.vmem [resolvable:$true] %s851
      %854 = dma.vmem_to_hbm [thread:$0]  %s852, 16, %s5, [#allocation6]
    $region41: #{tpu_custom_call.1} parent=1 // pred_fallthru
      _
    // Predicated region
    $region42: #{tpu_custom_call.1} parent=1 // pred_check
      _
    $region43: #{tpu_custom_call.1} parent=1 // pred_check_branch
      %856 = sbr.rel (0) target = $region45
    $region44: #{tpu_custom_call.1} parent=1 // pred_region
      %857 = dma.done [#allocation6], 16
    $region45: #{tpu_custom_call.1} parent=1 // pred_fallthru
      _
    %858 = vsyncpa [#allocation6], 1

</llo_original>
